<compile_context>
chip_gen: v7x
topology: tpu7x:2x2x1
jax: 0.10.0
libtpu: 0.0.40
codegen_flags: <defaults>
</compile_context>

<pallas_src>
import functools

import jax
import jax.numpy as jnp
from jax.experimental import pallas as pl
from jax.experimental.pallas import tpu as pltpu


def _make_band(n, r, dtype):
    """(n, n) all-ones band matrix: 1 where |i - j| <= r."""
    i = jax.lax.broadcasted_iota(jnp.int32, (n, n), 0)
    j = jax.lax.broadcasted_iota(jnp.int32, (n, n), 1)
    return (jnp.abs(i - j) <= r).astype(dtype)


def _cats_loss_kernel(tex_ref, bdr_ref, beta_ref,          # SMEM scalars
                      pred_ref, lab_ref,                    # (H, W) VMEM blocks
                      out_ref,                              # (8, 128) accumulator
                      brh_s, brw_s, b1h_s, b1w_s,           # bf16 band scratch
                      m_s, tmask_s, bmask_s,                # f32 (H, W) scratch
                      *, radius, mask_radius, balanced_w):
    p = pl.program_id(1)
    h, w = lab_ref.shape
    bf16 = jnp.bfloat16

    def box(x_bf16, bh, bw):
        # zero-padded all-ones conv == banded matmul pair (bf16 MXU, f32 acc)
        t = jnp.dot(x_bf16, bw, preferred_element_type=jnp.float32)
        return jnp.dot(bh, t.astype(bf16), preferred_element_type=jnp.float32)

    lab = lab_ref[...]
    label_w = (lab != 0.0).astype(jnp.float32)

    # ---- per-image work: first prediction only (p == 0) ----
    @pl.when(p == 0)
    def _setup():
        # Band matrices generated on-chip: no HBM traffic, single VMEM copy.
        brh_s[...] = _make_band(h, radius, bf16)
        brw_s[...] = _make_band(w, radius, bf16)
        b1h_s[...] = _make_band(h, 1, bf16)
        b1w_s[...] = _make_band(w, 1, bf16)

        lw_b = label_w.astype(bf16)
        # 0/1 operands, integer sums <= (2r+1)^2 -> exact in bf16/f32.
        texture_mask = box(lw_b, brh_s[...], brw_s[...])
        if mask_radius == radius:
            label_sums = texture_mask
        else:
            bmh = _make_band(h, mask_radius, bf16)
            bmw = _make_band(w, mask_radius, bf16)
            label_sums = box(lw_b, bmh, bmw)
        tmask_s[...] = 1.0 - (label_sums > 0.0).astype(jnp.float32)

        bmask = (texture_mask != 0.0).astype(jnp.float32)
        bmask_s[...] = jnp.where(label_w == 1.0, 0.0, bmask)

        # class-balanced BCE weight map (sequential mask-mutation semantics)
        beta = beta_ref[0, 0]
        m = jnp.where(lab == 1.0, beta, lab)
        m = jnp.where(m == 0.0, balanced_w * (1.0 - beta), m)
        m = jnp.where(m == 2.0, 0.0, m)
        m_s[...] = m

        out_ref[...] = jnp.zeros_like(out_ref)

    pred = pred_ref[...]

    # ---- class-balanced weighted BCE ----
    log_p = jnp.maximum(jnp.log(pred), -100.0)        # torch BCE clamps log @ -100
    log_1mp = jnp.maximum(jnp.log(1.0 - pred), -100.0)
    bce = -m_s[...] * (lab * log_p + (1.0 - lab) * log_1mp)

    # ---- texture suppression loss (3x3 ones box) ----
    pred_sums = box(pred.astype(bf16), b1h_s[...], b1w_s[...])
    tl = -jnp.log(jnp.clip(1.0 - pred_sums / 9.0, 1e-10, 1.0 - 1e-10))

    # ---- boundary tracing loss (two radius-r boxes, fused right multiply) ----
    bdr_pred = pred * label_w
    tex_pred = pred * (1.0 - label_w) * bmask_s[...]
    x2 = jnp.concatenate([bdr_pred, tex_pred], axis=0).astype(bf16)   # (2H, W)
    t2 = jnp.dot(x2, brw_s[...], preferred_element_type=jnp.float32).astype(bf16)
    pred_bdr_sum = label_w * jnp.dot(brh_s[...], t2[:h, :],
                                     preferred_element_type=jnp.float32)
    pred_texture_sum = jnp.dot(brh_s[...], t2[h:, :],
                               preferred_element_type=jnp.float32)
    softmax_map = jnp.clip(
        pred_bdr_sum / (pred_texture_sum + pred_bdr_sum + 1e-10),
        1e-10, 1.0 - 1e-10)
    bdr_map = -label_w * jnp.log(softmax_map)

    # single fused per-element map -> one XLU reduction; accumulate across p
    total_map = bce + tex_ref[p] * (tl * tmask_s[...]) + bdr_ref[p] * bdr_map
    out_ref[...] = out_ref[...] + jnp.sum(total_map)


def tracing_loss_dexi(inputs, targets,
                      l_weight=((0.05, 2.0), (0.05, 2.0), (0.05, 2.0),
                                (0.1, 1.0), (0.1, 1.0), (0.1, 1.0),
                                (0.01, 4.0)),
                      radius=4, mask_radius=4, balanced_w=1.1):
    """inputs: list of (N, C, H, W) predictions in (0,1); targets: (N, C, H, W)."""
    preds = jnp.stack([x.astype(jnp.float32) for x in inputs], axis=0)
    P, N, C, H, W = preds.shape
    NC = N * C
    preds = preds.reshape(P, NC, H, W)
    lab = targets.astype(jnp.float32).reshape(NC, H, W)

    lw = jnp.asarray(l_weight, dtype=jnp.float32)[:P]   # (P, 2)
    tex_w = lw[:, 0]
    bdr_w = lw[:, 1]

    # beta is a global label statistic, identical across the P predictions.
    num_pos = jnp.sum((lab == 1.0).astype(jnp.float32))
    num_neg = jnp.sum((lab == 0.0).astype(jnp.float32))
    beta = (num_neg / (num_pos + num_neg)).reshape(1, 1).astype(jnp.float32)

    kernel = functools.partial(_cats_loss_kernel,
                               radius=int(radius),
                               mask_radius=int(mask_radius),
                               balanced_w=float(balanced_w))
    smem = pltpu.MemorySpace.SMEM

    partials = pl.pallas_call(
        kernel,
        out_shape=jax.ShapeDtypeStruct((NC, 8, 128), jnp.float32),
        grid_spec=pltpu.PrefetchScalarGridSpec(
            num_scalar_prefetch=0,
            grid=(NC, P),
            in_specs=[
                pl.BlockSpec(memory_space=smem),                       # tex_w (P,)
                pl.BlockSpec(memory_space=smem),                       # bdr_w (P,)
                pl.BlockSpec(memory_space=smem),                       # beta (1,1)
                pl.BlockSpec((None, None, H, W), lambda i, p: (p, i, 0, 0)),
                pl.BlockSpec((None, H, W), lambda i, p: (i, 0, 0)),    # label
            ],
            out_specs=pl.BlockSpec((None, 8, 128), lambda i, p: (i, 0, 0)),
            scratch_shapes=[
                pltpu.VMEM((H, H), jnp.bfloat16),   # band, radius, rows
                pltpu.VMEM((W, W), jnp.bfloat16),   # band, radius, cols
                pltpu.VMEM((H, H), jnp.bfloat16),   # band, 3x3, rows
                pltpu.VMEM((W, W), jnp.bfloat16),   # band, 3x3, cols
                pltpu.VMEM((H, W), jnp.float32),    # BCE weight map
                pltpu.VMEM((H, W), jnp.float32),    # texture mask
                pltpu.VMEM((H, W), jnp.float32),    # boundary mask
            ]),
        compiler_params=pltpu.CompilerParams(
            dimension_semantics=("parallel", "arbitrary"),
            vmem_limit_bytes=64 * 1024 * 1024),
    )(tex_w, bdr_w, beta, preds, lab)

    return jnp.sum(partials[:, 0, 0])


# ------------------- pure-JAX reference (for checking) -------------------
def _ref_box(x_nchw, pad):
    k = jnp.ones((1, 1, 2 * pad + 1, 2 * pad + 1), jnp.float32)
    return jax.lax.conv_general_dilated(
        x_nchw, k, window_strides=(1, 1), padding=[(pad, pad), (pad, pad)])


def _ref_cats_loss(pred, lab, lweight, radius, mask_radius, balanced_w):
    tex_f, bdr_f = lweight
    pred = pred.astype(jnp.float32)
    lab = lab.astype(jnp.float32)
    num_pos = jnp.sum((lab == 1.0).astype(jnp.float32))
    num_neg = jnp.sum((lab == 0.0).astype(jnp.float32))
    beta = num_neg / (num_pos + num_neg)
    m = jnp.where(lab == 1.0, beta, lab)
    m = jnp.where(m == 0.0, balanced_w * (1.0 - beta), m)
    m = jnp.where(m == 2.0, 0.0, m)
    log_p = jnp.maximum(jnp.log(pred), -100.0)
    log_1mp = jnp.maximum(jnp.log(1.0 - pred), -100.0)
    cost = jnp.sum(-m * (lab * log_p + (1.0 - lab) * log_1mp))
    label_w = (lab != 0.0).astype(jnp.float32)
    # texture loss
    pred_sums = _ref_box(pred, 1)
    label_sums = _ref_box(label_w, mask_radius)
    tmask = 1.0 - (label_sums > 0.0).astype(jnp.float32)
    tl = -jnp.log(jnp.clip(1.0 - pred_sums / 9.0, 1e-10, 1.0 - 1e-10))
    textcost = jnp.sum(tl * tmask)
    # boundary loss
    bdr_pred = pred * label_w
    pred_bdr_sum = label_w * _ref_box(bdr_pred, radius)
    texture_mask = _ref_box(label_w, radius)
    bmask = (texture_mask != 0.0).astype(jnp.float32)
    bmask = jnp.where(label_w == 1.0, 0.0, bmask)
    pred_texture_sum = _ref_box(pred * (1.0 - label_w) * bmask, radius)
    softmax_map = jnp.clip(
        pred_bdr_sum / (pred_texture_sum + pred_bdr_sum + 1e-10),
        1e-10, 1.0 - 1e-10)
    bdrcost = jnp.sum(-label_w * jnp.log(softmax_map))
    return cost + bdr_f * bdrcost + tex_f * textcost


if __name__ == "__main__":
    key = jax.random.PRNGKey(0)
    N, C, H, W = 2, 1, 16, 16
    k_lab, *k_preds = jax.random.split(key, 8)

    # binary edge label map, predictions in (0, 1) as BCE requires
    targets = (jax.random.uniform(k_lab, (N, C, H, W)) > 0.8).astype(jnp.float32)
    inputs = [
        jax.nn.sigmoid(jax.random.normal(k, (N, C, H, W), dtype=jnp.float32))
        for k in k_preds
    ]  # 7 predictions, matching the 7-entry default l_weight

    loss = jax.block_until_ready(tracing_loss_dexi(inputs, targets))

    l_weight = ((0.05, 2.0), (0.05, 2.0), (0.05, 2.0),
                (0.1, 1.0), (0.1, 1.0), (0.1, 1.0), (0.01, 4.0))
    ref = sum(_ref_cats_loss(inputs[i], targets, l_weight[i], 4, 4, 1.1)
              for i in range(len(inputs)))
    ref = jax.block_until_ready(ref)

    assert jnp.isfinite(loss)
    # rtol slightly widened vs the f32 version to cover bf16 MXU box sums.
    assert jnp.allclose(loss, ref, rtol=5e-3, atol=5e-2), (float(loss), float(ref))
    print("KERNEL_OK")
</pallas_src>

<mosaic_0001>
module attributes {stable_mosaic.version = 11 : i64} {
  func.func @_cats_loss_kernel(%arg0: i32, %arg1: i32, %arg2: memref<7xf32, #tpu.memory_space<smem>>, %arg3: memref<7xf32, #tpu.memory_space<smem>>, %arg4: memref<1x1xf32, #tpu.memory_space<smem>>, %arg5: memref<1x1x16x16xf32, #tpu.memory_space<vmem>>, %arg6: memref<1x16x16xf32, #tpu.memory_space<vmem>>, %arg7: memref<1x8x128xf32, #tpu.memory_space<vmem>>, %arg8: memref<16x16xbf16, #tpu.memory_space<vmem>>, %arg9: memref<16x16xbf16, #tpu.memory_space<vmem>>, %arg10: memref<16x16xbf16, #tpu.memory_space<vmem>>, %arg11: memref<16x16xbf16, #tpu.memory_space<vmem>>, %arg12: memref<16x16xf32, #tpu.memory_space<vmem>>, %arg13: memref<16x16xf32, #tpu.memory_space<vmem>>, %arg14: memref<16x16xf32, #tpu.memory_space<vmem>>) attributes {dimension_semantics = [#tpu.dimension_semantics<parallel>, #tpu.dimension_semantics<arbitrary>], iteration_bounds = array<i64: 2, 7>, scalar_prefetch = 0 : i64, scratch_operands = 7 : i64, tpu.core_type = #tpu.core_type<tc>, window_params = [{transform_indices = @transform_0, window_bounds = array<i64: 7>}, {transform_indices = @transform_1, window_bounds = array<i64: 7>}, {transform_indices = @transform_2, window_bounds = array<i64: 1, 1>}, {transform_indices = @transform_3, window_bounds = array<i64: 1, 1, 16, 16>}, {transform_indices = @transform_4, window_bounds = array<i64: 1, 16, 16>}, {transform_indices = @transform_5, window_bounds = array<i64: 1, 8, 128>}]} {
    %c0 = arith.constant 0 : index
    %c0_0 = arith.constant 0 : index
    %c0_1 = arith.constant 0 : index
    %0 = vector.load %arg6[%c0, %c0_0, %c0_1] : memref<1x16x16xf32, #tpu.memory_space<vmem>>, vector<1x16x16xf32>
    %1 = vector.shape_cast %0 : vector<1x16x16xf32> to vector<16x16xf32>
    %cst = arith.constant 0.000000e+00 : f32
    %2 = vector.broadcast %cst : f32 to vector<16x16xf32>
    %3 = arith.cmpf one, %1, %2 : vector<16x16xf32>
    %4 = arith.extui %3 : vector<16x16xi1> to vector<16x16xi32>
    %5 = arith.sitofp %4 : vector<16x16xi32> to vector<16x16xf32>
    %c0_i32 = arith.constant 0 : i32
    %6 = arith.cmpi eq, %arg1, %c0_i32 : i32
    %7 = arith.extui %6 : i1 to i32
    %c0_i32_2 = arith.constant 0 : i32
    %8 = arith.cmpi ne, %7, %c0_i32_2 : i32
    scf.if %8 {
      %98 = tpu.iota {dimensions = array<i32: 0>} : vector<16x16xi32>
      %99 = tpu.iota {dimensions = array<i32: 1>} : vector<16x16xi32>
      %100 = arith.subi %98, %99 : vector<16x16xi32>
      %101 = math.absi %100 : vector<16x16xi32>
      %c4_i32 = arith.constant 4 : i32
      %102 = vector.broadcast %c4_i32 : i32 to vector<16x16xi32>
      %103 = arith.cmpi sle, %101, %102 : vector<16x16xi32>
      %104 = arith.extui %103 : vector<16x16xi1> to vector<16x16xi32>
      %105 = arith.sitofp %104 : vector<16x16xi32> to vector<16x16xf32>
      %106 = arith.truncf %105 : vector<16x16xf32> to vector<16x16xbf16>
      %c0_50 = arith.constant 0 : index
      %c0_51 = arith.constant 0 : index
      %107 = vector.load %arg8[%c0_50, %c0_51] : memref<16x16xbf16, #tpu.memory_space<vmem>>, vector<16x16xbf16>
      tpu.vector_store %arg8[%c0_50, %c0_51], %106 {strides = array<i32>} : memref<16x16xbf16, #tpu.memory_space<vmem>>, vector<16x16xbf16>,
      %108 = tpu.iota {dimensions = array<i32: 0>} : vector<16x16xi32>
      %109 = tpu.iota {dimensions = array<i32: 1>} : vector<16x16xi32>
      %110 = arith.subi %108, %109 : vector<16x16xi32>
      %111 = math.absi %110 : vector<16x16xi32>
      %c4_i32_52 = arith.constant 4 : i32
      %112 = vector.broadcast %c4_i32_52 : i32 to vector<16x16xi32>
      %113 = arith.cmpi sle, %111, %112 : vector<16x16xi32>
      %114 = arith.extui %113 : vector<16x16xi1> to vector<16x16xi32>
      %115 = arith.sitofp %114 : vector<16x16xi32> to vector<16x16xf32>
      %116 = arith.truncf %115 : vector<16x16xf32> to vector<16x16xbf16>
      %c0_53 = arith.constant 0 : index
      %c0_54 = arith.constant 0 : index
      %117 = vector.load %arg9[%c0_53, %c0_54] : memref<16x16xbf16, #tpu.memory_space<vmem>>, vector<16x16xbf16>
      tpu.vector_store %arg9[%c0_53, %c0_54], %116 {strides = array<i32>} : memref<16x16xbf16, #tpu.memory_space<vmem>>, vector<16x16xbf16>,
      %118 = tpu.iota {dimensions = array<i32: 0>} : vector<16x16xi32>
      %119 = tpu.iota {dimensions = array<i32: 1>} : vector<16x16xi32>
      %120 = arith.subi %118, %119 : vector<16x16xi32>
      %121 = math.absi %120 : vector<16x16xi32>
      %c1_i32 = arith.constant 1 : i32
      %122 = vector.broadcast %c1_i32 : i32 to vector<16x16xi32>
      %123 = arith.cmpi sle, %121, %122 : vector<16x16xi32>
      %124 = arith.extui %123 : vector<16x16xi1> to vector<16x16xi32>
      %125 = arith.sitofp %124 : vector<16x16xi32> to vector<16x16xf32>
      %126 = arith.truncf %125 : vector<16x16xf32> to vector<16x16xbf16>
      %c0_55 = arith.constant 0 : index
      %c0_56 = arith.constant 0 : index
      %127 = vector.load %arg10[%c0_55, %c0_56] : memref<16x16xbf16, #tpu.memory_space<vmem>>, vector<16x16xbf16>
      tpu.vector_store %arg10[%c0_55, %c0_56], %126 {strides = array<i32>} : memref<16x16xbf16, #tpu.memory_space<vmem>>, vector<16x16xbf16>,
      %128 = tpu.iota {dimensions = array<i32: 0>} : vector<16x16xi32>
      %129 = tpu.iota {dimensions = array<i32: 1>} : vector<16x16xi32>
      %130 = arith.subi %128, %129 : vector<16x16xi32>
      %131 = math.absi %130 : vector<16x16xi32>
      %c1_i32_57 = arith.constant 1 : i32
      %132 = vector.broadcast %c1_i32_57 : i32 to vector<16x16xi32>
      %133 = arith.cmpi sle, %131, %132 : vector<16x16xi32>
      %134 = arith.extui %133 : vector<16x16xi1> to vector<16x16xi32>
      %135 = arith.sitofp %134 : vector<16x16xi32> to vector<16x16xf32>
      %136 = arith.truncf %135 : vector<16x16xf32> to vector<16x16xbf16>
      %c0_58 = arith.constant 0 : index
      %c0_59 = arith.constant 0 : index
      %137 = vector.load %arg11[%c0_58, %c0_59] : memref<16x16xbf16, #tpu.memory_space<vmem>>, vector<16x16xbf16>
      tpu.vector_store %arg11[%c0_58, %c0_59], %136 {strides = array<i32>} : memref<16x16xbf16, #tpu.memory_space<vmem>>, vector<16x16xbf16>,
      %138 = arith.truncf %5 : vector<16x16xf32> to vector<16x16xbf16>
      %c0_60 = arith.constant 0 : index
      %c0_61 = arith.constant 0 : index
      %139 = vector.load %arg8[%c0_60, %c0_61] : memref<16x16xbf16, #tpu.memory_space<vmem>>, vector<16x16xbf16>
      %c0_62 = arith.constant 0 : index
      %c0_63 = arith.constant 0 : index
      %140 = vector.load %arg9[%c0_62, %c0_63] : memref<16x16xbf16, #tpu.memory_space<vmem>>, vector<16x16xbf16>
      %cst_64 = arith.constant dense<0.000000e+00> : vector<16x16xf32>
      %141 = tpu.matmul %138, %140, %cst_64 {dimension_numbers = #tpu.dot_dimension_numbers<[1], [0], [0], [1], [0, 0, 1, 1], [], []>} : vector<16x16xbf16>, vector<16x16xbf16>, vector<16x16xf32> -> vector<16x16xf32>
      %142 = arith.truncf %141 : vector<16x16xf32> to vector<16x16xbf16>
      %cst_65 = arith.constant dense<0.000000e+00> : vector<16x16xf32>
      %143 = tpu.matmul %139, %142, %cst_65 {dimension_numbers = #tpu.dot_dimension_numbers<[1], [0], [0], [1], [0, 0, 1, 1], [], []>} : vector<16x16xbf16>, vector<16x16xbf16>, vector<16x16xf32> -> vector<16x16xf32>
      %cst_66 = arith.constant 0.000000e+00 : f32
      %144 = vector.broadcast %cst_66 : f32 to vector<16x16xf32>
      %145 = arith.cmpf ogt, %143, %144 : vector<16x16xf32>
      %146 = arith.extui %145 : vector<16x16xi1> to vector<16x16xi32>
      %147 = arith.sitofp %146 : vector<16x16xi32> to vector<16x16xf32>
      %cst_67 = arith.constant 1.000000e+00 : f32
      %148 = vector.broadcast %cst_67 : f32 to vector<16x16xf32>
      %149 = arith.subf %148, %147 : vector<16x16xf32>
      %c0_68 = arith.constant 0 : index
      %c0_69 = arith.constant 0 : index
      %150 = vector.load %arg13[%c0_68, %c0_69] : memref<16x16xf32, #tpu.memory_space<vmem>>, vector<16x16xf32>
      tpu.vector_store %arg13[%c0_68, %c0_69], %149 {strides = array<i32>} : memref<16x16xf32, #tpu.memory_space<vmem>>, vector<16x16xf32>,
      %cst_70 = arith.constant 0.000000e+00 : f32
      %151 = vector.broadcast %cst_70 : f32 to vector<16x16xf32>
      %152 = arith.cmpf one, %143, %151 : vector<16x16xf32>
      %153 = arith.extui %152 : vector<16x16xi1> to vector<16x16xi32>
      %154 = arith.sitofp %153 : vector<16x16xi32> to vector<16x16xf32>
      %cst_71 = arith.constant 1.000000e+00 : f32
      %155 = vector.broadcast %cst_71 : f32 to vector<16x16xf32>
      %156 = arith.cmpf oeq, %5, %155 : vector<16x16xf32>
      %cst_72 = arith.constant 0.000000e+00 : f32
      %157 = vector.broadcast %cst_72 : f32 to vector<16x16xf32>
      %158 = arith.select %156, %157, %154 : vector<16x16xi1>, vector<16x16xf32>
      %c0_73 = arith.constant 0 : index
      %c0_74 = arith.constant 0 : index
      %159 = vector.load %arg14[%c0_73, %c0_74] : memref<16x16xf32, #tpu.memory_space<vmem>>, vector<16x16xf32>
      tpu.vector_store %arg14[%c0_73, %c0_74], %158 {strides = array<i32>} : memref<16x16xf32, #tpu.memory_space<vmem>>, vector<16x16xf32>,
      %c0_75 = arith.constant 0 : index
      %c0_76 = arith.constant 0 : index
      %160 = memref.load %arg4[%c0_75, %c0_76] : memref<1x1xf32, #tpu.memory_space<smem>>
      %cst_77 = arith.constant 1.000000e+00 : f32
      %161 = vector.broadcast %cst_77 : f32 to vector<16x16xf32>
      %162 = arith.cmpf oeq, %1, %161 : vector<16x16xf32>
      %163 = vector.broadcast %160 : f32 to vector<16x16xf32>
      %164 = arith.select %162, %163, %1 : vector<16x16xi1>, vector<16x16xf32>
      %cst_78 = arith.constant 0.000000e+00 : f32
      %165 = vector.broadcast %cst_78 : f32 to vector<16x16xf32>
      %166 = arith.cmpf oeq, %164, %165 : vector<16x16xf32>
      %cst_79 = arith.constant 1.000000e+00 : f32
      %167 = arith.subf %cst_79, %160 : f32
      %cst_80 = arith.constant 1.100000e+00 : f32
      %168 = arith.mulf %cst_80, %167 : f32
      %169 = vector.broadcast %168 : f32 to vector<16x16xf32>
      %170 = arith.select %166, %169, %164 : vector<16x16xi1>, vector<16x16xf32>
      %cst_81 = arith.constant 2.000000e+00 : f32
      %171 = vector.broadcast %cst_81 : f32 to vector<16x16xf32>
      %172 = arith.cmpf oeq, %170, %171 : vector<16x16xf32>
      %cst_82 = arith.constant 0.000000e+00 : f32
      %173 = vector.broadcast %cst_82 : f32 to vector<16x16xf32>
      %174 = arith.select %172, %173, %170 : vector<16x16xi1>, vector<16x16xf32>
      %c0_83 = arith.constant 0 : index
      %c0_84 = arith.constant 0 : index
      %175 = vector.load %arg12[%c0_83, %c0_84] : memref<16x16xf32, #tpu.memory_space<vmem>>, vector<16x16xf32>
      tpu.vector_store %arg12[%c0_83, %c0_84], %174 {strides = array<i32>} : memref<16x16xf32, #tpu.memory_space<vmem>>, vector<16x16xf32>,
      %cst_85 = arith.constant 0.000000e+00 : f32
      %176 = vector.broadcast %cst_85 : f32 to vector<8x128xf32>
      %c0_86 = arith.constant 0 : index
      %c0_87 = arith.constant 0 : index
      %c0_88 = arith.constant 0 : index
      %177 = vector.load %arg7[%c0_86, %c0_87, %c0_88] : memref<1x8x128xf32, #tpu.memory_space<vmem>>, vector<1x8x128xf32>
      %178 = vector.shape_cast %177 : vector<1x8x128xf32> to vector<8x128xf32>
      %179 = vector.shape_cast %176 : vector<8x128xf32> to vector<1x8x128xf32>
      tpu.vector_store %arg7[%c0_86, %c0_87, %c0_88], %179 {strides = array<i32>} : memref<1x8x128xf32, #tpu.memory_space<vmem>>, vector<1x8x128xf32>,
    } else {
    }
    %c0_3 = arith.constant 0 : index
    %c0_4 = arith.constant 0 : index
    %c0_5 = arith.constant 0 : index
    %c0_6 = arith.constant 0 : index
    %9 = vector.load %arg5[%c0_3, %c0_4, %c0_5, %c0_6] : memref<1x1x16x16xf32, #tpu.memory_space<vmem>>, vector<1x1x16x16xf32>
    %10 = vector.shape_cast %9 : vector<1x1x16x16xf32> to vector<16x16xf32>
    %11 = math.log %10 : vector<16x16xf32>
    %cst_7 = arith.constant -1.000000e+02 : f32
    %12 = vector.broadcast %cst_7 : f32 to vector<16x16xf32>
    %13 = arith.maximumf %11, %12 : vector<16x16xf32>
    %cst_8 = arith.constant 1.000000e+00 : f32
    %14 = vector.broadcast %cst_8 : f32 to vector<16x16xf32>
    %15 = arith.subf %14, %10 : vector<16x16xf32>
    %16 = math.log %15 : vector<16x16xf32>
    %cst_9 = arith.constant -1.000000e+02 : f32
    %17 = vector.broadcast %cst_9 : f32 to vector<16x16xf32>
    %18 = arith.maximumf %16, %17 : vector<16x16xf32>
    %c0_10 = arith.constant 0 : index
    %c0_11 = arith.constant 0 : index
    %19 = vector.load %arg12[%c0_10, %c0_11] : memref<16x16xf32, #tpu.memory_space<vmem>>, vector<16x16xf32>
    %cst_12 = arith.constant 0.000000e+00 : f32
    %20 = vector.broadcast %cst_12 : f32 to vector<16x16xf32>
    %21 = arith.subf %20, %19 : vector<16x16xf32>
    %22 = arith.mulf %1, %13 : vector<16x16xf32>
    %cst_13 = arith.constant 1.000000e+00 : f32
    %23 = vector.broadcast %cst_13 : f32 to vector<16x16xf32>
    %24 = arith.subf %23, %1 : vector<16x16xf32>
    %25 = arith.mulf %24, %18 : vector<16x16xf32>
    %26 = arith.addf %22, %25 : vector<16x16xf32>
    %27 = arith.mulf %21, %26 : vector<16x16xf32>
    %28 = arith.truncf %10 : vector<16x16xf32> to vector<16x16xbf16>
    %c0_14 = arith.constant 0 : index
    %c0_15 = arith.constant 0 : index
    %29 = vector.load %arg10[%c0_14, %c0_15] : memref<16x16xbf16, #tpu.memory_space<vmem>>, vector<16x16xbf16>
    %c0_16 = arith.constant 0 : index
    %c0_17 = arith.constant 0 : index
    %30 = vector.load %arg11[%c0_16, %c0_17] : memref<16x16xbf16, #tpu.memory_space<vmem>>, vector<16x16xbf16>
    %cst_18 = arith.constant dense<0.000000e+00> : vector<16x16xf32>
    %31 = tpu.matmul %28, %30, %cst_18 {dimension_numbers = #tpu.dot_dimension_numbers<[1], [0], [0], [1], [0, 0, 1, 1], [], []>} : vector<16x16xbf16>, vector<16x16xbf16>, vector<16x16xf32> -> vector<16x16xf32>
    %32 = arith.truncf %31 : vector<16x16xf32> to vector<16x16xbf16>
    %cst_19 = arith.constant dense<0.000000e+00> : vector<16x16xf32>
    %33 = tpu.matmul %29, %32, %cst_19 {dimension_numbers = #tpu.dot_dimension_numbers<[1], [0], [0], [1], [0, 0, 1, 1], [], []>} : vector<16x16xbf16>, vector<16x16xbf16>, vector<16x16xf32> -> vector<16x16xf32>
    %cst_20 = arith.constant 9.000000e+00 : f32
    %34 = vector.broadcast %cst_20 : f32 to vector<16x16xf32>
    %35 = arith.divf %33, %34 : vector<16x16xf32>
    %cst_21 = arith.constant 1.000000e+00 : f32
    %36 = vector.broadcast %cst_21 : f32 to vector<16x16xf32>
    %37 = arith.subf %36, %35 : vector<16x16xf32>
    %cst_22 = arith.constant 1.000000e-10 : f32
    %cst_23 = arith.constant 1.000000e+00 : f32
    %38 = vector.broadcast %cst_22 : f32 to vector<16x16xf32>
    %39 = arith.maximumf %38, %37 : vector<16x16xf32>
    %40 = vector.broadcast %cst_23 : f32 to vector<16x16xf32>
    %41 = arith.minimumf %40, %39 : vector<16x16xf32>
    %42 = math.log %41 : vector<16x16xf32>
    %cst_24 = arith.constant 0.000000e+00 : f32
    %43 = vector.broadcast %cst_24 : f32 to vector<16x16xf32>
    %44 = arith.subf %43, %42 : vector<16x16xf32>
    %45 = arith.mulf %10, %5 : vector<16x16xf32>
    %cst_25 = arith.constant 1.000000e+00 : f32
    %46 = vector.broadcast %cst_25 : f32 to vector<16x16xf32>
    %47 = arith.subf %46, %5 : vector<16x16xf32>
    %48 = arith.mulf %10, %47 : vector<16x16xf32>
    %c0_26 = arith.constant 0 : index
    %c0_27 = arith.constant 0 : index
    %49 = vector.load %arg14[%c0_26, %c0_27] : memref<16x16xf32, #tpu.memory_space<vmem>>, vector<16x16xf32>
    %50 = arith.mulf %48, %49 : vector<16x16xf32>
    %51 = tpu.concatenate %45, %50 in 0 : vector<16x16xf32>, vector<16x16xf32> -> vector<32x16xf32>
    %52 = arith.truncf %51 : vector<32x16xf32> to vector<32x16xbf16>
    %c0_28 = arith.constant 0 : index
    %c0_29 = arith.constant 0 : index
    %53 = vector.load %arg9[%c0_28, %c0_29] : memref<16x16xbf16, #tpu.memory_space<vmem>>, vector<16x16xbf16>
    %cst_30 = arith.constant dense<0.000000e+00> : vector<32x16xf32>
    %54 = tpu.matmul %52, %53, %cst_30 {dimension_numbers = #tpu.dot_dimension_numbers<[1], [0], [0], [1], [0, 0, 1, 1], [], []>} : vector<32x16xbf16>, vector<16x16xbf16>, vector<32x16xf32> -> vector<32x16xf32>
    %55 = arith.truncf %54 : vector<32x16xf32> to vector<32x16xbf16>
    %c0_31 = arith.constant 0 : index
    %c0_32 = arith.constant 0 : index
    %56 = vector.load %arg8[%c0_31, %c0_32] : memref<16x16xbf16, #tpu.memory_space<vmem>>, vector<16x16xbf16>
    %57 = vector.extract_strided_slice %55 {offsets = [0, 0], sizes = [16, 16], strides = [1, 1]} : vector<32x16xbf16> to vector<16x16xbf16>
    %cst_33 = arith.constant dense<0.000000e+00> : vector<16x16xf32>
    %58 = tpu.matmul %56, %57, %cst_33 {dimension_numbers = #tpu.dot_dimension_numbers<[1], [0], [0], [1], [0, 0, 1, 1], [], []>} : vector<16x16xbf16>, vector<16x16xbf16>, vector<16x16xf32> -> vector<16x16xf32>
    %59 = arith.mulf %5, %58 : vector<16x16xf32>
    %c0_34 = arith.constant 0 : index
    %c0_35 = arith.constant 0 : index
    %60 = vector.load %arg8[%c0_34, %c0_35] : memref<16x16xbf16, #tpu.memory_space<vmem>>, vector<16x16xbf16>
    %61 = vector.extract_strided_slice %55 {offsets = [16, 0], sizes = [16, 16], strides = [1, 1]} : vector<32x16xbf16> to vector<16x16xbf16>
    %cst_36 = arith.constant dense<0.000000e+00> : vector<16x16xf32>
    %62 = tpu.matmul %60, %61, %cst_36 {dimension_numbers = #tpu.dot_dimension_numbers<[1], [0], [0], [1], [0, 0, 1, 1], [], []>} : vector<16x16xbf16>, vector<16x16xbf16>, vector<16x16xf32> -> vector<16x16xf32>
    %63 = arith.addf %62, %59 : vector<16x16xf32>
    %cst_37 = arith.constant 1.000000e-10 : f32
    %64 = vector.broadcast %cst_37 : f32 to vector<16x16xf32>
    %65 = arith.addf %63, %64 : vector<16x16xf32>
    %66 = arith.divf %59, %65 : vector<16x16xf32>
    %cst_38 = arith.constant 1.000000e-10 : f32
    %cst_39 = arith.constant 1.000000e+00 : f32
    %67 = vector.broadcast %cst_38 : f32 to vector<16x16xf32>
    %68 = arith.maximumf %67, %66 : vector<16x16xf32>
    %69 = vector.broadcast %cst_39 : f32 to vector<16x16xf32>
    %70 = arith.minimumf %69, %68 : vector<16x16xf32>
    %cst_40 = arith.constant 0.000000e+00 : f32
    %71 = vector.broadcast %cst_40 : f32 to vector<16x16xf32>
    %72 = arith.subf %71, %5 : vector<16x16xf32>
    %73 = math.log %70 : vector<16x16xf32>
    %74 = arith.mulf %72, %73 : vector<16x16xf32>
    %75 = arith.index_cast %arg1 : i32 to index
    %76 = memref.load %arg2[%75] : memref<7xf32, #tpu.memory_space<smem>>
    %c0_41 = arith.constant 0 : index
    %c0_42 = arith.constant 0 : index
    %77 = vector.load %arg13[%c0_41, %c0_42] : memref<16x16xf32, #tpu.memory_space<vmem>>, vector<16x16xf32>
    %78 = arith.mulf %44, %77 : vector<16x16xf32>
    %79 = vector.broadcast %76 : f32 to vector<16x16xf32>
    %80 = arith.mulf %79, %78 : vector<16x16xf32>
    %81 = arith.addf %27, %80 : vector<16x16xf32>
    %82 = arith.index_cast %arg1 : i32 to index
    %83 = memref.load %arg3[%82] : memref<7xf32, #tpu.memory_space<smem>>
    %84 = vector.broadcast %83 : f32 to vector<16x16xf32>
    %85 = arith.mulf %84, %74 : vector<16x16xf32>
    %86 = arith.addf %81, %85 : vector<16x16xf32>
    %c0_43 = arith.constant 0 : index
    %c0_44 = arith.constant 0 : index
    %c0_45 = arith.constant 0 : index
    %87 = vector.load %arg7[%c0_43, %c0_44, %c0_45] : memref<1x8x128xf32, #tpu.memory_space<vmem>>, vector<1x8x128xf32>
    %88 = vector.shape_cast %87 : vector<1x8x128xf32> to vector<8x128xf32>
    %89 = vector.shape_cast %86 : vector<16x16xf32> to vector<1x16x16xf32>
    %cst_46 = arith.constant dense<0.000000e+00> : vector<1xf32>
    %90 = vector.multi_reduction <add>, %89, %cst_46 [1, 2] : vector<1x16x16xf32> to vector<1xf32>
    %91 = vector.shape_cast %90 : vector<1xf32> to vector<1x1x1xf32>
    %92 = vector.extract %91[0, 0, 0] : f32 from vector<1x1x1xf32>
    %93 = vector.broadcast %92 : f32 to vector<8x128xf32>
    %94 = arith.addf %88, %93 : vector<8x128xf32>
    %c0_47 = arith.constant 0 : index
    %c0_48 = arith.constant 0 : index
    %c0_49 = arith.constant 0 : index
    %95 = vector.load %arg7[%c0_47, %c0_48, %c0_49] : memref<1x8x128xf32, #tpu.memory_space<vmem>>, vector<1x8x128xf32>
    %96 = vector.shape_cast %95 : vector<1x8x128xf32> to vector<8x128xf32>
    %97 = vector.shape_cast %94 : vector<8x128xf32> to vector<1x8x128xf32>
    tpu.vector_store %arg7[%c0_47, %c0_48, %c0_49], %97 {strides = array<i32>} : memref<1x8x128xf32, #tpu.memory_space<vmem>>, vector<1x8x128xf32>,
    return
  }
  func.func @transform_0(%arg0: i32, %arg1: i32) -> i32 {
    %c0_i32 = arith.constant 0 : i32
    %c0_i32_0 = arith.constant 0 : i32
    return %c0_i32 : i32
  }
  func.func @transform_1(%arg0: i32, %arg1: i32) -> i32 {
    %c0_i32 = arith.constant 0 : i32
    %c0_i32_0 = arith.constant 0 : i32
    return %c0_i32 : i32
  }
  func.func @transform_2(%arg0: i32, %arg1: i32) -> (i32, i32) {
    %c0_i32 = arith.constant 0 : i32
    %c0_i32_0 = arith.constant 0 : i32
    %c0_i32_1 = arith.constant 0 : i32
    return %c0_i32, %c0_i32_0 : i32, i32
  }
  func.func @transform_3(%arg0: i32, %arg1: i32) -> (i32, i32, i32, i32) {
    %c0_i32 = arith.constant 0 : i32
    %c0_i32_0 = arith.constant 0 : i32
    %c0_i32_1 = arith.constant 0 : i32
    return %arg1, %arg0, %c0_i32, %c0_i32_0 : i32, i32, i32, i32
  }
  func.func @transform_4(%arg0: i32, %arg1: i32) -> (i32, i32, i32) {
    %c0_i32 = arith.constant 0 : i32
    %c0_i32_0 = arith.constant 0 : i32
    %c0_i32_1 = arith.constant 0 : i32
    return %arg0, %c0_i32, %c0_i32_0 : i32, i32, i32
  }
  func.func @transform_5(%arg0: i32, %arg1: i32) -> (i32, i32, i32) {
    %c0_i32 = arith.constant 0 : i32
    %c0_i32_0 = arith.constant 0 : i32
    %c0_i32_1 = arith.constant 0 : i32
    return %arg0, %c0_i32, %c0_i32_0 : i32, i32, i32
  }
}

</mosaic_0001>

<llo_original>
// kernel: tpu_custom_call.1
$region0: #{tpu_custom_call.1}
  #allocation0 [shape = 'u32[]', space=smem, size = 0x4, offset = 0x4, fixed_abs, tag = 'smem constant byte address 0x4 - core index']
  #allocation1 [shape = 'u32[144,128]{1,0:T(1,128)}', space=vmem, size = 0x12000, scoped, tag = 'internal scratch']
  #allocation2 [shape = 'bf16[16,16]{1,0:T(16,128)(2,1)}', space=vmem, size = 0x1000, scoped, tag = 'scratch operand']
  #allocation3 [shape = 'bf16[16,16]{1,0:T(16,128)(2,1)}', space=vmem, size = 0x1000, scoped, tag = 'scratch operand']
  #allocation4 [shape = 'bf16[16,16]{1,0:T(16,128)(2,1)}', space=vmem, size = 0x1000, scoped, tag = 'scratch operand']
  #allocation5 [shape = 'bf16[16,16]{1,0:T(16,128)(2,1)}', space=vmem, size = 0x1000, scoped, tag = 'scratch operand']
  #allocation6 [shape = 'f32[16,16]{1,0:T(8,128)}', space=vmem, size = 0x2000, scoped, tag = 'scratch operand']
  #allocation7 [shape = 'f32[16,16]{1,0:T(8,128)}', space=vmem, size = 0x2000, scoped, tag = 'scratch operand']
  #allocation8 [shape = 'f32[16,16]{1,0:T(8,128)}', space=vmem, size = 0x2000, scoped, tag = 'scratch operand']
  #allocation9 [shape = 'f32[1,1]{1,0:T(1,128)S(6)}', space=smem, size = 0x200, scoped, tag = 'scoped memory for tpu_custom_call.1']
  %s0 = inlined_call_operand.hbm [shape: f32[7], index: 0, kind: input, shape index: {}]
  %s1 = inlined_call_operand.hbm [shape: f32[7], index: 1, kind: input, shape index: {}]
  %s2 = inlined_call_operand.<no memory space> [shape: f32[1,1], index: 2, kind: input, shape index: {}]
  %s3 = inlined_call_operand.hbm [shape: f32[7,2,16,16], index: 3, kind: input, shape index: {}]
  %s4 = inlined_call_operand.hbm [shape: f32[2,16,16], index: 4, kind: input, shape index: {}]
  %s5 = inlined_call_operand.hbm [shape: f32[2,8,128], index: 5, kind: output, shape index: {}]
  %s6 = sld [smem:[#allocation0]]
  $region73: #{tpu_custom_call.1} parent=0
    _
  %s8 = ssub.s32 1, %s6
  %s9 = scalar_select 0, %s8, %s6
  %10 = sst [smem:[#allocation9]] %s2
  $region1: #{tpu_custom_call.1} parent=0
    #allocation10 [shape = 'u8[512]{0}', space=smem, size = 0x200, scoped, tag = 'input window, operand 0, single buffered']
    #allocation11 [shape = 's32[2]{0}', space=sflag, size = 0x8, scoped, tag = 'scoped memory for tpu_custom_call.1']
    #allocation12 [shape = 's32[2]{0}', space=sflag, size = 0x8, scoped, tag = 'scoped memory for tpu_custom_call.1']
    #allocation13 [shape = 's32[2]{0}', space=sflag, size = 0x8, scoped, tag = 'scoped memory for tpu_custom_call.1']
    #allocation14 [shape = 'u8[512]{0}', space=smem, size = 0x200, scoped, tag = 'input window, operand 1, single buffered']
    #allocation15 [shape = 's32[1]{0}', space=sflag, size = 0x4, scoped, tag = 'scoped memory for tpu_custom_call.1']
    #allocation16 [shape = 'u8[16384]{0}', space=vmem, size = 0x4000, scoped, tag = 'input window, operand 3']
    #allocation17 [shape = 'u8[16384]{0}', space=vmem, size = 0x4000, scoped, tag = 'input window, operand 4']
    #allocation18 [shape = 's32[2]{0}', space=sflag, size = 0x8, scoped, tag = 'scoped memory for tpu_custom_call.1']
    #allocation19 [shape = 'u8[8192]{0}', space=vmem, size = 0x2000, scoped, tag = 'output window, operand 0']
    %11 = vsyncpa [#allocation13], 0
    %12 = vsyncpa [#allocation15], 0
    %13 = vsyncpa [#allocation11], 0
    %s14 = scalar_lea.sflag [#allocation11], 1
    %15 = vsyncpa %s14, 0
    %16 = vsyncpa [#allocation18], 0
    %s17 = scalar_lea.sflag [#allocation18], 1
    %18 = vsyncpa %s17, 0
    %19 = vsyncpa [#allocation12], 0
    %s20 = scalar_lea.sflag [#allocation12], 1
    %21 = vsyncpa %s20, 0
    loop: start=0, step=1, limit=16
    $region2: #{tpu_custom_call.1} parent=1 // loop_pre_header
      _
    $region3: #{tpu_custom_call.1} parent=1 // loop_header
      %s23 = sphi 0, %s27
      %p24 = scmp.ge.s32.totalorder %s23, 16
      %s30 = sphi 0, %s42
      %s31 = sphi 0, %s38
      %s32 = sphi 0, %s30
      %s33 = sphi 0, %s31
      %s34 = sphi 0, %s32
      %s35 = sphi 0, %s33
      %s43 = sphi 0, %s43
      %s45 = sphi 0, %s43
      %s46 = sphi 0, %s45
      %s60 = sphi 0, %s46
      %s64 = sphi 0, %s64
      %s66 = sphi 0, %s64
      %s67 = sphi 0, %s66
      %s81 = sphi 0, %s67
      %s85 = sphi 0, %s85
      %s87 = sphi 0, %s85
      %s88 = sphi 0, %s87
      %s102 = sphi 0, %s88
      %s110 = sphi 0, %s112
      %s113 = sphi 0, %s110
      %s114 = sphi 0, %s113
      %s130 = sphi 0, %s114
      %s136 = sphi 0, %s138
      %s139 = sphi 0, %s136
      %s140 = sphi 0, %s139
      %s156 = sphi 0, %s140
      %s162 = sphi 0, %s164
      %s165 = sphi 0, %s162
      %s166 = sphi 0, %s165
      %s182 = sphi 0, %s166
    $region4: #{tpu_custom_call.1} parent=1 // loop_header_branch
      %26 = sbr.rel (%p24) target = $region8
    $region5: #{tpu_custom_call.1} parent=1 // loop_body
      %s28 = ssub.s32 %s23, 1
      %s29 = ssub.s32 %s23, 2
      %s36 = sadd.s32 1, %s31
      %p37 = scmp.ge.s32.totalorder %s36, 7
      %s38 = scalar_select %p37, 0, %s36
      %s39 = sadd.s32 1, %s30
      %s40 = scalar_select %p37, %s39, %s30
      %p41 = scmp.ge.s32.totalorder %s40, 2
      %s42 = scalar_select %p41, 0, %s40
      %s44 = sadd.s32 %s43, 1
      %p47 = scmp.eq.s32.totalorder %s23, 13
      %p48 = scmp.ne.s32.totalorder %s43, %s45
      %p49 = scmp.eq.s32.totalorder %s23, 0
      %p50 = por %p48, %p49
      %p51 = scmp.ne.s32.totalorder %s43, %s45
      %p52 = scmp.eq.s32.totalorder %s28, 13
      %p53 = por %p51, %p52
      %p54 = scmp.ne.s32.totalorder %s45, %s46
      %p55 = scmp.eq.s32.totalorder %s28, 0
      %p56 = por %p54, %p55
      %p57 = scmp.ne.s32.totalorder %s45, %s46
      %p58 = scmp.eq.s32.totalorder %s29, 13
      %p59 = por %p57, %p58
      %p61 = scmp.ne.s32.totalorder %s46, %s60
      %p62 = scmp.eq.s32.totalorder %s29, 0
      %p63 = por %p61, %p62
      %s65 = sadd.s32 %s64, 1
      %p68 = scmp.eq.s32.totalorder %s23, 13
      %p69 = scmp.ne.s32.totalorder %s64, %s66
      %p70 = scmp.eq.s32.totalorder %s23, 0
      %p71 = por %p69, %p70
      %p72 = scmp.ne.s32.totalorder %s64, %s66
      %p73 = scmp.eq.s32.totalorder %s28, 13
      %p74 = por %p72, %p73
      %p75 = scmp.ne.s32.totalorder %s66, %s67
      %p76 = scmp.eq.s32.totalorder %s28, 0
      %p77 = por %p75, %p76
      %p78 = scmp.ne.s32.totalorder %s66, %s67
      %p79 = scmp.eq.s32.totalorder %s29, 13
      %p80 = por %p78, %p79
      %p82 = scmp.ne.s32.totalorder %s67, %s81
      %p83 = scmp.eq.s32.totalorder %s29, 0
      %p84 = por %p82, %p83
      %s86 = sadd.s32 %s85, 1
      %p89 = scmp.eq.s32.totalorder %s23, 13
      %p90 = scmp.ne.s32.totalorder %s85, %s87
      %p91 = scmp.eq.s32.totalorder %s23, 0
      %p92 = por %p90, %p91
      %p93 = scmp.ne.s32.totalorder %s85, %s87
      %p94 = scmp.eq.s32.totalorder %s28, 13
      %p95 = por %p93, %p94
      %p96 = scmp.ne.s32.totalorder %s87, %s88
      %p97 = scmp.eq.s32.totalorder %s28, 0
      %p98 = por %p96, %p97
      %p99 = scmp.ne.s32.totalorder %s87, %s88
      %p100 = scmp.eq.s32.totalorder %s29, 13
      %p101 = por %p99, %p100
      %p103 = scmp.ne.s32.totalorder %s88, %s102
      %p104 = scmp.eq.s32.totalorder %s29, 0
      %p105 = por %p103, %p104
      %s106 = ssub.s32 %s31, %s38
      %s107 = ssub.s32 %s30, %s42
      %s108 = sor.u32 %s106, %s107
      %p109 = scmp.eq.s32.totalorder %s108, 0
      %s111 = sadd.s32 %s110, 1
      %s112 = scalar_select %p109, %s110, %s111
      %p115 = pneg %p109
      %p116 = scmp.eq.s32.totalorder %s23, 13
      %p117 = por %p115, %p116
      %p118 = scmp.ne.s32.totalorder %s110, %s113
      %p119 = scmp.eq.s32.totalorder %s23, 0
      %p120 = por %p118, %p119
      %p121 = scmp.ne.s32.totalorder %s110, %s113
      %p122 = scmp.eq.s32.totalorder %s28, 13
      %p123 = por %p121, %p122
      %p124 = scmp.ne.s32.totalorder %s113, %s114
      %p125 = scmp.eq.s32.totalorder %s28, 0
      %p126 = por %p124, %p125
      %p127 = scmp.ne.s32.totalorder %s113, %s114
      %p128 = scmp.eq.s32.totalorder %s29, 13
      %p129 = por %p127, %p128
      %p131 = scmp.ne.s32.totalorder %s114, %s130
      %p132 = scmp.eq.s32.totalorder %s29, 0
      %p133 = por %p131, %p132
      %s134 = ssub.s32 %s30, %s42
      %p135 = scmp.eq.s32.totalorder %s134, 0
      %s137 = sadd.s32 %s136, 1
      %s138 = scalar_select %p135, %s136, %s137
      %p141 = pneg %p135
      %p142 = scmp.eq.s32.totalorder %s23, 13
      %p143 = por %p141, %p142
      %p144 = scmp.ne.s32.totalorder %s136, %s139
      %p145 = scmp.eq.s32.totalorder %s23, 0
      %p146 = por %p144, %p145
      %p147 = scmp.ne.s32.totalorder %s136, %s139
      %p148 = scmp.eq.s32.totalorder %s28, 13
      %p149 = por %p147, %p148
      %p150 = scmp.ne.s32.totalorder %s139, %s140
      %p151 = scmp.eq.s32.totalorder %s28, 0
      %p152 = por %p150, %p151
      %p153 = scmp.ne.s32.totalorder %s139, %s140
      %p154 = scmp.eq.s32.totalorder %s29, 13
      %p155 = por %p153, %p154
      %p157 = scmp.ne.s32.totalorder %s140, %s156
      %p158 = scmp.eq.s32.totalorder %s29, 0
      %p159 = por %p157, %p158
      %s160 = ssub.s32 %s30, %s42
      %p161 = scmp.eq.s32.totalorder %s160, 0
      %s163 = sadd.s32 %s162, 1
      %s164 = scalar_select %p161, %s162, %s163
      %p167 = pneg %p161
      %p168 = scmp.eq.s32.totalorder %s23, 13
      %p169 = por %p167, %p168
      %p170 = scmp.ne.s32.totalorder %s162, %s165
      %p171 = scmp.eq.s32.totalorder %s23, 0
      %p172 = por %p170, %p171
      %p173 = scmp.ne.s32.totalorder %s162, %s165
      %p174 = scmp.eq.s32.totalorder %s28, 13
      %p175 = por %p173, %p174
      %p176 = scmp.ne.s32.totalorder %s165, %s166
      %p177 = scmp.eq.s32.totalorder %s28, 0
      %p178 = por %p176, %p177
      %p179 = scmp.ne.s32.totalorder %s165, %s166
      %p180 = scmp.eq.s32.totalorder %s29, 13
      %p181 = por %p179, %p180
      %p183 = scmp.ne.s32.totalorder %s166, %s182
      %p184 = scmp.eq.s32.totalorder %s29, 0
      %p185 = por %p183, %p184
      %p186 = scmp.le.s32.totalorder 1, %s23
      %p187 = scmp.lt.s32.totalorder %s23, 15
      %p188 = pnand %p186, %p187
      %p189 = pneg %p188
      // Predicated region
      $region9: #{tpu_custom_call.1} parent=5 // pred_check
        _
      $region10: #{tpu_custom_call.1} parent=5 // pred_check_branch
        %191 = sbr.rel (%p188) target = $region12
      $region11: #{tpu_custom_call.1} parent=5 // pred_region
        %s192 = ssub.s32 %s23, 1
        // Predicated region
        $region13: #{tpu_custom_call.1} parent=11 // pred_check
          %p193 = pneg %p56
        $region14: #{tpu_custom_call.1} parent=11 // pred_check_branch
          %195 = sbr.rel (%p193) target = $region16
        $region15: #{tpu_custom_call.1} parent=11 // pred_region
          %s197 = ssub.s32 16, 16
          %198 = vsyncadd [#allocation13], %s197
          %201 = dma.hbm_to_smem %s0, 16, [#allocation10], [#allocation13]
        $region16: #{tpu_custom_call.1} parent=11 // pred_fallthru
          _
        // Predicated region
        $region17: #{tpu_custom_call.1} parent=11 // pred_check
          %p202 = pneg %p77
        $region18: #{tpu_custom_call.1} parent=11 // pred_check_branch
          %204 = sbr.rel (%p202) target = $region20
        $region19: #{tpu_custom_call.1} parent=11 // pred_region
          %s206 = ssub.s32 16, 16
          %207 = vsyncadd [#allocation15], %s206
          %210 = dma.hbm_to_smem %s1, 16, [#allocation14], [#allocation15]
        $region20: #{tpu_custom_call.1} parent=11 // pred_fallthru
          _
        // Predicated region
        $region21: #{tpu_custom_call.1} parent=11 // pred_check
          %p211 = pneg %p98
        $region22: #{tpu_custom_call.1} parent=11 // pred_check_branch
          %213 = sbr.rel (%p211) target = $region24
        $region23: #{tpu_custom_call.1} parent=11 // pred_region
          _
        $region24: #{tpu_custom_call.1} parent=11 // pred_fallthru
          _
      $region12: #{tpu_custom_call.1} parent=5 // pred_fallthru
        _
      %p214 = scmp.lt.s32.totalorder %s23, 14
      // Predicated region
      $region25: #{tpu_custom_call.1} parent=5 // pred_check
        %p215 = pneg %p214
      $region26: #{tpu_custom_call.1} parent=5 // pred_check_branch
        %217 = sbr.rel (%p215) target = $region28
      $region27: #{tpu_custom_call.1} parent=5 // pred_region
        // Predicated region
        $region29: #{tpu_custom_call.1} parent=27 // pred_check
          %p218 = pneg %p120
        $region30: #{tpu_custom_call.1} parent=27 // pred_check_branch
          %220 = sbr.rel (%p218) target = $region32
        $region31: #{tpu_custom_call.1} parent=27 // pred_region
          %s221 = sand.u32 %s110, 1
          %s222 = scalar_lea.sflag [#allocation11], %s221
          %s223 = sand.u32 %s110, 1
          %s224 = smul.addr %s223, 16
          %s225 = scalar_lea.vmem [#allocation16], %s224
          %s227 = ssub.s32 256, 256
          %228 = vsyncadd %s222, %s227
          %s229 = smul.addr %s30, 2
          %s230 = smul.addr %s31, 4
          %s231 = sadd.s32 %s229, %s230
          %s232 = smul.addr %s231, 128
          %s233 = scalar_lea.hbm %s3, %s232
          %s234 = sshll.u32 %s225, 4
          %s235 = int_to_ptr.vmem [resolvable:$true] %s234
          %240 = dma.hbm_to_vmem [thread:$0]  %s233, 256, %s235, %s222, 128, 128, 8
        $region32: #{tpu_custom_call.1} parent=27 // pred_fallthru
          _
        // Predicated region
        $region33: #{tpu_custom_call.1} parent=27 // pred_check
          %p241 = pneg %p146
        $region34: #{tpu_custom_call.1} parent=27 // pred_check_branch
          %243 = sbr.rel (%p241) target = $region36
        $region35: #{tpu_custom_call.1} parent=27 // pred_region
          %s244 = sand.u32 %s136, 1
          %s245 = scalar_lea.sflag [#allocation18], %s244
          %s246 = sand.u32 %s136, 1
          %s247 = smul.addr %s246, 16
          %s248 = scalar_lea.vmem [#allocation17], %s247
          %s250 = ssub.s32 256, 256
          %251 = vsyncadd %s245, %s250
          %s252 = smul.addr %s30, 2
          %s253 = smul.addr %s252, 128
          %s254 = scalar_lea.hbm %s4, %s253
          %s255 = sshll.u32 %s248, 4
          %s256 = int_to_ptr.vmem [resolvable:$true] %s255
          %261 = dma.hbm_to_vmem [thread:$0]  %s254, 256, %s256, %s245, 128, 128, 8
        $region36: #{tpu_custom_call.1} parent=27 // pred_fallthru
          _
      $region28: #{tpu_custom_call.1} parent=5 // pred_fallthru
        _
      %p262 = scmp.le.s32.totalorder 1, %s23
      %p263 = scmp.lt.s32.totalorder %s23, 15
      %p264 = pnand %p262, %p263
      %p265 = pneg %p264
      // Predicated region
      $region37: #{tpu_custom_call.1} parent=5 // pred_check
        _
      $region38: #{tpu_custom_call.1} parent=5 // pred_check_branch
        %267 = sbr.rel (%p264) target = $region40
      $region39: #{tpu_custom_call.1} parent=5 // pred_region
        %s268 = ssub.s32 %s23, 1
        // Predicated region
        $region41: #{tpu_custom_call.1} parent=39 // pred_check
          %p269 = pneg %p56
        $region42: #{tpu_custom_call.1} parent=39 // pred_check_branch
          %271 = sbr.rel (%p269) target = $region44
        $region43: #{tpu_custom_call.1} parent=39 // pred_region
          %272 = dma.done [#allocation13], 16
        $region44: #{tpu_custom_call.1} parent=39 // pred_fallthru
          _
        // Predicated region
        $region45: #{tpu_custom_call.1} parent=39 // pred_check
          %p273 = pneg %p77
        $region46: #{tpu_custom_call.1} parent=39 // pred_check_branch
          %275 = sbr.rel (%p273) target = $region48
        $region47: #{tpu_custom_call.1} parent=39 // pred_region
          %276 = dma.done [#allocation15], 16
        $region48: #{tpu_custom_call.1} parent=39 // pred_fallthru
          _
        %s277 = sand.u32 %s113, 1
        %s278 = scalar_lea.sflag [#allocation11], %s277
        %s279 = sand.u32 %s113, 1
        %s280 = smul.addr %s279, 16
        %s281 = scalar_lea.vmem [#allocation16], %s280
        // Predicated region
        $region49: #{tpu_custom_call.1} parent=39 // pred_check
          %p282 = pneg %p126
        $region50: #{tpu_custom_call.1} parent=39 // pred_check_branch
          %284 = sbr.rel (%p282) target = $region52
        $region51: #{tpu_custom_call.1} parent=39 // pred_region
          %285 = dma.done %s278, 256
        $region52: #{tpu_custom_call.1} parent=39 // pred_fallthru
          _
        %s286 = sand.u32 %s139, 1
        %s287 = scalar_lea.sflag [#allocation18], %s286
        %s288 = sand.u32 %s139, 1
        %s289 = smul.addr %s288, 16
        %s290 = scalar_lea.vmem [#allocation17], %s289
        // Predicated region
        $region53: #{tpu_custom_call.1} parent=39 // pred_check
          %p291 = pneg %p152
        $region54: #{tpu_custom_call.1} parent=39 // pred_check_branch
          %293 = sbr.rel (%p291) target = $region56
        $region55: #{tpu_custom_call.1} parent=39 // pred_region
          %294 = dma.done %s287, 256
        $region56: #{tpu_custom_call.1} parent=39 // pred_fallthru
          _
        %295 = sfence
        %p296 = pneg %p56
        %p297 = pneg %p53
        %p298 = pneg %p77
        %p299 = pneg %p74
        %p300 = pneg %p98
        %p301 = pneg %p95
        %s302 = sand.u32 %s113, 1
        %s303 = scalar_lea.sflag [#allocation11], %s302
        %s304 = sand.u32 %s113, 1
        %s305 = smul.addr %s304, 16
        %s306 = scalar_lea.vmem [#allocation16], %s305
        %p307 = pneg %p126
        %p308 = pneg %p123
        %s309 = sand.u32 %s139, 1
        %s310 = scalar_lea.sflag [#allocation18], %s309
        %s311 = sand.u32 %s139, 1
        %s312 = smul.addr %s311, 16
        %s313 = scalar_lea.vmem [#allocation17], %s312
        %p314 = pneg %p152
        %p315 = pneg %p149
        %p316 = pneg %p178
        %p317 = pneg %p175
        %s318 = sand.u32 %s165, 1
        %s319 = scalar_lea.sflag [#allocation12], %s318
        %s320 = sand.u32 %s165, 1
        %s321 = smul.addr %s320, 8
        %s322 = scalar_lea.vmem [#allocation19], %s321
        %v324 = vld [vmem:[%s290] sm:$0xff]
        %v325 = vld [vmem:[%s290 + $0x8] sm:$0xff]
        %vm326 = vcmp.ne.f32.partialorder %v324, 0.0
        %vm327 = vcmp.ne.f32.partialorder %v325, 0.0
        %v328 = vsel %vm326, 1, 0
        %v329 = vsel %vm327, 1, 0
        %v330 = vcvt.s32.f32 %v328
        %v331 = vcvt.s32.f32 %v329
        %p332 = scmp.eq.s32.totalorder %s33, 0
        // Predicated region
        $region57: #{tpu_custom_call.1} parent=39 // pred_check
          %p333 = pneg %p332
        $region58: #{tpu_custom_call.1} parent=39 // pred_check_branch
          %335 = sbr.rel (%p333) target = $region60
        $region59: #{tpu_custom_call.1} parent=39 // pred_region
          %v336 = vlaneseq
          %v337 = vshrl.u32 %v336, 7
          %v338 = vadd.s32 %v337, 8
          %v339 = vlaneseq
          %v340 = vand.u32 %v339, 127
          %v341 = vsub.s32 %v337, %v340
          %v342 = vsub.s32 %v338, %v340
          %vm343 = vcmp.lt.s32.totalorder %v341, 0
          %v344 = vsub.s32 0, %v341
          %v345 = vsel %vm343, %v344, %v341
          %vm346 = vcmp.lt.s32.totalorder %v342, 0
          %v347 = vsub.s32 0, %v342
          %v348 = vsel %vm346, %v347, %v342
          %vm349 = vcmp.le.s32.totalorder %v345, 4
          %vm350 = vcmp.le.s32.totalorder %v348, 4
          %v351 = vsel %vm349, 1, 0
          %v352 = vsel %vm350, 1, 0
          %v353 = vcvt.s32.f32 %v351
          %v354 = vcvt.s32.f32 %v352
          %v355 = vpack.c.bf16 %v354, %v353
          %vm356 = vcmask 130048
          %357 = vst.msk [vmem:[#allocation2] sm:$0xff] %vm356, %v355
          %358 = vst.msk [vmem:[#allocation3] sm:$0xff] %vm356, %v355
          %vm359 = vcmp.le.s32.totalorder %v345, 1
          %vm360 = vcmp.le.s32.totalorder %v348, 1
          %v361 = vsel %vm359, 1, 0
          %v362 = vsel %vm360, 1, 0
          %v363 = vcvt.s32.f32 %v361
          %v364 = vcvt.s32.f32 %v362
          %v365 = vpack.c.bf16 %v364, %v363
          %366 = vst.msk [vmem:[#allocation4] sm:$0xff] %vm356, %v365
          %367 = vst.msk [vmem:[#allocation5] sm:$0xff] %vm356, %v365
          %v368 = vpack.c.bf16 %v331, %v330
          %v369 = vld [vmem:[#allocation2] sm:$0xff]
          %v370 = vld [vmem:[#allocation3] sm:$0xff]
          %v372 = vsel %vm356, %v368, 0
          %374 = vmatprep.subr.bf16.mxu0 0
          %375 = vmatpush1.bf16.msra.mxu0 %v370
          %376 = vmatprep.subr.bf16.mxu0 0
          %377 = vmatpush1.bf16.msra.mxu0 0
          %378 = vmatprep.subr.bf16.mxu0 0
          %379 = vmatpush1.bf16.msra.mxu0 0
          %380 = vmatprep.subr.bf16.mxu0 0
          %381 = vmatpush1.bf16.msra.mxu0 0
          %382 = vmatprep.subr.bf16.mxu0 0
          %383 = vmatpush1.bf16.msra.mxu0 0
          %384 = vmatprep.subr.bf16.mxu0 0
          %385 = vmatpush1.bf16.msra.mxu0 0
          %386 = vmatprep.subr.bf16.mxu0 0
          %387 = vmatpush1.bf16.msra.mxu0 0
          %388 = vmatprep.subr.bf16.mxu0 0
          %389 = vmatpush1.bf16.msra.mxu0 0
          %390 = vmatprep.subr.bf16.mxu0 0
          %391 = vmatpush1.bf16.msra.mxu0 0
          %392 = vmatprep.subr.bf16.mxu0 0
          %393 = vmatpush1.bf16.msra.mxu0 0
          %394 = vmatprep.subr.bf16.mxu0 0
          %395 = vmatpush1.bf16.msra.mxu0 0
          %396 = vmatprep.subr.bf16.mxu0 0
          %397 = vmatpush1.bf16.msra.mxu0 0
          %398 = vmatprep.subr.bf16.mxu0 0
          %399 = vmatpush1.bf16.msra.mxu0 0
          %400 = vmatprep.subr.bf16.mxu0 0
          %401 = vmatpush1.bf16.msra.mxu0 0
          %402 = vmatprep.subr.bf16.mxu0 0
          %403 = vmatpush1.bf16.msra.mxu0 0
          %404 = vmatprep.subr.bf16.mxu0 0
          %405 = vmatpush1.bf16.msra.mxu0 0
          %406 = vmatprep.mubr.bf16.mxu0 0
          %407 = vmatmul.mubr.bf16.gmra.mrb[0].mxu0 %v372
          %v408 = vpop.f32.mrb[0].mxu0
          %v409 = vadd.f32 0.0, %v408
          %v410 = vpop.f32.mrb[0].mxu0
          %v411 = vpop.f32.mrb[0].mxu0
          %v412 = vadd.f32 0.0, %v411
          %v413 = vpop.f32.mrb[0].mxu0
          %414 = vdwg.mxu0
          %v415 = vpack.c.bf16 %v412, %v409
          %v417 = vsel %vm356, %v369, 0
          %419 = vmatprep.subr.bf16.mxu0 0
          %420 = vmatpush1.bf16.msra.mxu0 %v415
          %421 = vmatprep.subr.bf16.mxu0 0
          %422 = vmatpush1.bf16.msra.mxu0 0
          %423 = vmatprep.subr.bf16.mxu0 0
          %424 = vmatpush1.bf16.msra.mxu0 0
          %425 = vmatprep.subr.bf16.mxu0 0
          %426 = vmatpush1.bf16.msra.mxu0 0
          %427 = vmatprep.subr.bf16.mxu0 0
          %428 = vmatpush1.bf16.msra.mxu0 0
          %429 = vmatprep.subr.bf16.mxu0 0
          %430 = vmatpush1.bf16.msra.mxu0 0
          %431 = vmatprep.subr.bf16.mxu0 0
          %432 = vmatpush1.bf16.msra.mxu0 0
          %433 = vmatprep.subr.bf16.mxu0 0
          %434 = vmatpush1.bf16.msra.mxu0 0
          %435 = vmatprep.subr.bf16.mxu0 0
          %436 = vmatpush1.bf16.msra.mxu0 0
          %437 = vmatprep.subr.bf16.mxu0 0
          %438 = vmatpush1.bf16.msra.mxu0 0
          %439 = vmatprep.subr.bf16.mxu0 0
          %440 = vmatpush1.bf16.msra.mxu0 0
          %441 = vmatprep.subr.bf16.mxu0 0
          %442 = vmatpush1.bf16.msra.mxu0 0
          %443 = vmatprep.subr.bf16.mxu0 0
          %444 = vmatpush1.bf16.msra.mxu0 0
          %445 = vmatprep.subr.bf16.mxu0 0
          %446 = vmatpush1.bf16.msra.mxu0 0
          %447 = vmatprep.subr.bf16.mxu0 0
          %448 = vmatpush1.bf16.msra.mxu0 0
          %449 = vmatprep.subr.bf16.mxu0 0
          %450 = vmatpush1.bf16.msra.mxu0 0
          %451 = vmatprep.mubr.bf16.mxu0 0
          %452 = vmatmul.mubr.bf16.gmra.mrb[0].mxu0 %v417
          %v453 = vpop.f32.mrb[0].mxu0
          %v454 = vadd.f32 0.0, %v453
          %v455 = vpop.f32.mrb[0].mxu0
          %v456 = vpop.f32.mrb[0].mxu0
          %v457 = vadd.f32 0.0, %v456
          %v458 = vpop.f32.mrb[0].mxu0
          %459 = vdwg.mxu0
          %vm460 = vcmp.gt.f32.partialorder %v454, 0.0
          %vm461 = vcmp.gt.f32.partialorder %v457, 0.0
          %v462 = vsel %vm460, 1, 0
          %v463 = vsel %vm461, 1, 0
          %v464 = vcvt.s32.f32 %v462
          %v465 = vcvt.s32.f32 %v463
          %v466 = vsub.f32 1.0, %v464
          %v467 = vsub.f32 1.0, %v465
          %468 = vst.msk [vmem:[#allocation7] sm:$0xff] %vm356, %v466
          %469 = vst.msk [vmem:[#allocation7 + $0x8] sm:$0xff] %vm356, %v467
          %vm470 = vcmp.ne.f32.partialorder %v454, 0.0
          %vm471 = vcmp.ne.f32.partialorder %v457, 0.0
          %v472 = vsel %vm470, 1, 0
          %v473 = vsel %vm471, 1, 0
          %v474 = vcvt.s32.f32 %v472
          %v475 = vcvt.s32.f32 %v473
          %vm476 = vcmp.eq.f32.partialorder %v330, 1.0
          %vm477 = vcmp.eq.f32.partialorder %v331, 1.0
          %v478 = vsel %vm476, 0.0, %v474
          %v479 = vsel %vm477, 0.0, %v475
          %480 = vst.msk [vmem:[#allocation8] sm:$0xff] %vm356, %v478
          %481 = vst.msk [vmem:[#allocation8 + $0x8] sm:$0xff] %vm356, %v479
          %s482 = sld [smem:[#allocation9]]
          %vm483 = vcmp.eq.f32.partialorder %v324, 1.0
          %vm484 = vcmp.eq.f32.partialorder %v325, 1.0
          %v485 = vstv %s482
          %v486 = vsel %vm483, %v485, %v324
          %v487 = vsel %vm484, %v485, %v325
          %vm488 = vcmp.eq.f32.partialorder %v486, 0.0
          %vm489 = vcmp.eq.f32.partialorder %v487, 0.0
          %s490 = ssub.f32 1.0, %s482
          %s491 = smul.f32 %s490, 1.1
          %v492 = vstv %s491
          %v493 = vsel %vm488, %v492, %v486
          %v494 = vsel %vm489, %v492, %v487
          %vm495 = vcmp.eq.f32.partialorder %v493, 2.0
          %vm496 = vcmp.eq.f32.partialorder %v494, 2.0
          %v497 = vsel %vm495, 0.0, %v493
          %v498 = vsel %vm496, 0.0, %v494
          %499 = vst.msk [vmem:[#allocation6] sm:$0xff] %vm356, %v497
          %500 = vst.msk [vmem:[#allocation6 + $0x8] sm:$0xff] %vm356, %v498
          %501 = vst [vmem:[%s322] sm:$0xff] 0.0
        $region60: #{tpu_custom_call.1} parent=39 // pred_fallthru
          _
        %v502 = vld [vmem:[%s281] sm:$0xff]
        %v503 = vld [vmem:[%s281 + $0x8] sm:$0xff]
        %v504 = vlog2.pop %v502
        %v505 = vmul.f32 %v504, 0.6931472
        %v506 = vlog2.pop %v503
        %v507 = vmul.f32 %v506, 0.6931472
        %v508 = vmax.f32 %v505, -100.0
        %v509 = vmax.f32 %v507, -100.0
        %v510 = vsub.f32 1.0, %v502
        %v511 = vsub.f32 1.0, %v503
        %v512 = vlog2.pop %v510
        %v513 = vmul.f32 %v512, 0.6931472
        %v514 = vlog2.pop %v511
        %v515 = vmul.f32 %v514, 0.6931472
        %v516 = vmax.f32 %v513, -100.0
        %v517 = vmax.f32 %v515, -100.0
        %v518 = vld [vmem:[#allocation6] sm:$0xff]
        %v519 = vld [vmem:[#allocation6 + $0x8] sm:$0xff]
        %v520 = vsub.f32 0.0, %v518
        %v521 = vsub.f32 0.0, %v519
        %v522 = vmul.f32 %v324, %v508
        %v523 = vmul.f32 %v325, %v509
        %v524 = vsub.f32 1.0, %v324
        %v525 = vsub.f32 1.0, %v325
        %v526 = vmul.f32 %v524, %v516
        %v527 = vmul.f32 %v525, %v517
        %v528 = vadd.f32 %v522, %v526
        %v529 = vadd.f32 %v523, %v527
        %v530 = vmul.f32 %v520, %v528
        %v531 = vmul.f32 %v521, %v529
        %v532 = vpack.c.bf16 %v503, %v502
        %v533 = vld [vmem:[#allocation4] sm:$0xff]
        %v534 = vld [vmem:[#allocation5] sm:$0xff]
        %vm535 = vcmask 130048
        %v537 = vsel %vm535, %v532, 0
        %539 = vmatprep.subr.bf16.mxu0 0
        %540 = vmatpush1.bf16.msra.mxu0 %v534
        %541 = vmatprep.subr.bf16.mxu0 0
        %542 = vmatpush1.bf16.msra.mxu0 0
        %543 = vmatprep.subr.bf16.mxu0 0
        %544 = vmatpush1.bf16.msra.mxu0 0
        %545 = vmatprep.subr.bf16.mxu0 0
        %546 = vmatpush1.bf16.msra.mxu0 0
        %547 = vmatprep.subr.bf16.mxu0 0
        %548 = vmatpush1.bf16.msra.mxu0 0
        %549 = vmatprep.subr.bf16.mxu0 0
        %550 = vmatpush1.bf16.msra.mxu0 0
        %551 = vmatprep.subr.bf16.mxu0 0
        %552 = vmatpush1.bf16.msra.mxu0 0
        %553 = vmatprep.subr.bf16.mxu0 0
        %554 = vmatpush1.bf16.msra.mxu0 0
        %555 = vmatprep.subr.bf16.mxu0 0
        %556 = vmatpush1.bf16.msra.mxu0 0
        %557 = vmatprep.subr.bf16.mxu0 0
        %558 = vmatpush1.bf16.msra.mxu0 0
        %559 = vmatprep.subr.bf16.mxu0 0
        %560 = vmatpush1.bf16.msra.mxu0 0
        %561 = vmatprep.subr.bf16.mxu0 0
        %562 = vmatpush1.bf16.msra.mxu0 0
        %563 = vmatprep.subr.bf16.mxu0 0
        %564 = vmatpush1.bf16.msra.mxu0 0
        %565 = vmatprep.subr.bf16.mxu0 0
        %566 = vmatpush1.bf16.msra.mxu0 0
        %567 = vmatprep.subr.bf16.mxu0 0
        %568 = vmatpush1.bf16.msra.mxu0 0
        %569 = vmatprep.subr.bf16.mxu0 0
        %570 = vmatpush1.bf16.msra.mxu0 0
        %571 = vmatprep.mubr.bf16.mxu0 0
        %572 = vmatmul.mubr.bf16.gmra.mrb[0].mxu0 %v537
        %v573 = vpop.f32.mrb[0].mxu0
        %v574 = vadd.f32 0.0, %v573
        %v575 = vpop.f32.mrb[0].mxu0
        %v576 = vpop.f32.mrb[0].mxu0
        %v577 = vadd.f32 0.0, %v576
        %v578 = vpop.f32.mrb[0].mxu0
        %579 = vdwg.mxu0
        %v580 = vpack.c.bf16 %v577, %v574
        %v582 = vsel %vm535, %v533, 0
        %584 = vmatprep.subr.bf16.mxu0 0
        %585 = vmatpush1.bf16.msra.mxu0 %v580
        %586 = vmatprep.subr.bf16.mxu0 0
        %587 = vmatpush1.bf16.msra.mxu0 0
        %588 = vmatprep.subr.bf16.mxu0 0
        %589 = vmatpush1.bf16.msra.mxu0 0
        %590 = vmatprep.subr.bf16.mxu0 0
        %591 = vmatpush1.bf16.msra.mxu0 0
        %592 = vmatprep.subr.bf16.mxu0 0
        %593 = vmatpush1.bf16.msra.mxu0 0
        %594 = vmatprep.subr.bf16.mxu0 0
        %595 = vmatpush1.bf16.msra.mxu0 0
        %596 = vmatprep.subr.bf16.mxu0 0
        %597 = vmatpush1.bf16.msra.mxu0 0
        %598 = vmatprep.subr.bf16.mxu0 0
        %599 = vmatpush1.bf16.msra.mxu0 0
        %600 = vmatprep.subr.bf16.mxu0 0
        %601 = vmatpush1.bf16.msra.mxu0 0
        %602 = vmatprep.subr.bf16.mxu0 0
        %603 = vmatpush1.bf16.msra.mxu0 0
        %604 = vmatprep.subr.bf16.mxu0 0
        %605 = vmatpush1.bf16.msra.mxu0 0
        %606 = vmatprep.subr.bf16.mxu0 0
        %607 = vmatpush1.bf16.msra.mxu0 0
        %608 = vmatprep.subr.bf16.mxu0 0
        %609 = vmatpush1.bf16.msra.mxu0 0
        %610 = vmatprep.subr.bf16.mxu0 0
        %611 = vmatpush1.bf16.msra.mxu0 0
        %612 = vmatprep.subr.bf16.mxu0 0
        %613 = vmatpush1.bf16.msra.mxu0 0
        %614 = vmatprep.subr.bf16.mxu0 0
        %615 = vmatpush1.bf16.msra.mxu0 0
        %616 = vmatprep.mubr.bf16.mxu0 0
        %617 = vmatmul.mubr.bf16.gmra.mrb[0].mxu0 %v582
        %v618 = vpop.f32.mrb[0].mxu0
        %v619 = vadd.f32 0.0, %v618
        %v620 = vpop.f32.mrb[0].mxu0
        %v621 = vpop.f32.mrb[0].mxu0
        %v622 = vadd.f32 0.0, %v621
        %v623 = vpop.f32.mrb[0].mxu0
        %624 = vdwg.mxu0
        %v625 = vrcp.pop 9.0
        %v626 = vmul.f32 %v619, %v625
        %v627 = vmul.f32 %v622, %v625
        %v628 = vsub.f32 1.0, %v626
        %v629 = vsub.f32 1.0, %v627
        %v630 = vmax.f32 %v628, 1e-10
        %v631 = vmax.f32 %v629, 1e-10
        %v632 = vmin.f32 %v630, 1.0
        %v633 = vmin.f32 %v631, 1.0
        %v634 = vlog2.pop %v632
        %v635 = vmul.f32 %v634, 0.6931472
        %v636 = vlog2.pop %v633
        %v637 = vmul.f32 %v636, 0.6931472
        %v638 = vsub.f32 0.0, %v635
        %v639 = vsub.f32 0.0, %v637
        %v640 = vmul.f32 %v502, %v330
        %v641 = vmul.f32 %v503, %v331
        %v642 = vsub.f32 1.0, %v330
        %v643 = vsub.f32 1.0, %v331
        %v644 = vmul.f32 %v502, %v642
        %v645 = vmul.f32 %v503, %v643
        %v646 = vld [vmem:[#allocation8] sm:$0xff]
        %v647 = vld [vmem:[#allocation8 + $0x8] sm:$0xff]
        %v648 = vmul.f32 %v644, %v646
        %v649 = vmul.f32 %v645, %v647
        %v650 = vpack.c.bf16 %v641, %v640
        %v651 = vpack.c.bf16 %v649, %v648
        %v652 = vld [vmem:[#allocation3] sm:$0xff]
        %v654 = vsel %vm535, %v650, 0
        %v657 = vsel %vm535, %v651, 0
        %659 = vmatprep.subr.bf16.mxu0 0
        %660 = vmatpush1.bf16.msra.mxu0 %v652
        %661 = vmatprep.subr.bf16.mxu0 0
        %662 = vmatpush1.bf16.msra.mxu0 0
        %663 = vmatprep.subr.bf16.mxu0 0
        %664 = vmatpush1.bf16.msra.mxu0 0
        %665 = vmatprep.subr.bf16.mxu0 0
        %666 = vmatpush1.bf16.msra.mxu0 0
        %667 = vmatprep.subr.bf16.mxu0 0
        %668 = vmatpush1.bf16.msra.mxu0 0
        %669 = vmatprep.subr.bf16.mxu0 0
        %670 = vmatpush1.bf16.msra.mxu0 0
        %671 = vmatprep.subr.bf16.mxu0 0
        %672 = vmatpush1.bf16.msra.mxu0 0
        %673 = vmatprep.subr.bf16.mxu0 0
        %674 = vmatpush1.bf16.msra.mxu0 0
        %675 = vmatprep.subr.bf16.mxu0 0
        %676 = vmatpush1.bf16.msra.mxu0 0
        %677 = vmatprep.subr.bf16.mxu0 0
        %678 = vmatpush1.bf16.msra.mxu0 0
        %679 = vmatprep.subr.bf16.mxu0 0
        %680 = vmatpush1.bf16.msra.mxu0 0
        %681 = vmatprep.subr.bf16.mxu0 0
        %682 = vmatpush1.bf16.msra.mxu0 0
        %683 = vmatprep.subr.bf16.mxu0 0
        %684 = vmatpush1.bf16.msra.mxu0 0
        %685 = vmatprep.subr.bf16.mxu0 0
        %686 = vmatpush1.bf16.msra.mxu0 0
        %687 = vmatprep.subr.bf16.mxu0 0
        %688 = vmatpush1.bf16.msra.mxu0 0
        %689 = vmatprep.subr.bf16.mxu0 0
        %690 = vmatpush1.bf16.msra.mxu0 0
        %691 = vmatprep.mubr.bf16.mxu0 0
        %692 = vmatmul.mubr.bf16.gmra.mrb[0].mxu0 %v654
        %v693 = vpop.f32.mrb[0].mxu0
        %v694 = vadd.f32 0.0, %v693
        %v695 = vpop.f32.mrb[0].mxu0
        %v696 = vpop.f32.mrb[0].mxu0
        %v697 = vadd.f32 0.0, %v696
        %v698 = vpop.f32.mrb[0].mxu0
        %699 = vmatprep.mubr.bf16.mxu0 0
        %700 = vmatmul.mubr.bf16.gmra.mrb[0].mxu0 %v657
        %v701 = vpop.f32.mrb[0].mxu0
        %v702 = vadd.f32 0.0, %v701
        %v703 = vpop.f32.mrb[0].mxu0
        %v704 = vpop.f32.mrb[0].mxu0
        %v705 = vadd.f32 0.0, %v704
        %v706 = vpop.f32.mrb[0].mxu0
        %707 = vdwg.mxu0
        %v708 = vpack.c.bf16 %v697, %v694
        %v709 = vpack.c.bf16 %v705, %v702
        %v710 = vld [vmem:[#allocation2] sm:$0xff]
        %v712 = vsel %vm535, %v710, 0
        %714 = vmatprep.subr.bf16.mxu0 0
        %715 = vmatpush1.bf16.msra.mxu0 %v708
        %716 = vmatprep.subr.bf16.mxu0 0
        %717 = vmatpush1.bf16.msra.mxu0 0
        %718 = vmatprep.subr.bf16.mxu0 0
        %719 = vmatpush1.bf16.msra.mxu0 0
        %720 = vmatprep.subr.bf16.mxu0 0
        %721 = vmatpush1.bf16.msra.mxu0 0
        %722 = vmatprep.subr.bf16.mxu0 0
        %723 = vmatpush1.bf16.msra.mxu0 0
        %724 = vmatprep.subr.bf16.mxu0 0
        %725 = vmatpush1.bf16.msra.mxu0 0
        %726 = vmatprep.subr.bf16.mxu0 0
        %727 = vmatpush1.bf16.msra.mxu0 0
        %728 = vmatprep.subr.bf16.mxu0 0
        %729 = vmatpush1.bf16.msra.mxu0 0
        %730 = vmatprep.subr.bf16.mxu0 0
        %731 = vmatpush1.bf16.msra.mxu0 0
        %732 = vmatprep.subr.bf16.mxu0 0
        %733 = vmatpush1.bf16.msra.mxu0 0
        %734 = vmatprep.subr.bf16.mxu0 0
        %735 = vmatpush1.bf16.msra.mxu0 0
        %736 = vmatprep.subr.bf16.mxu0 0
        %737 = vmatpush1.bf16.msra.mxu0 0
        %738 = vmatprep.subr.bf16.mxu0 0
        %739 = vmatpush1.bf16.msra.mxu0 0
        %740 = vmatprep.subr.bf16.mxu0 0
        %741 = vmatpush1.bf16.msra.mxu0 0
        %742 = vmatprep.subr.bf16.mxu0 0
        %743 = vmatpush1.bf16.msra.mxu0 0
        %744 = vmatprep.subr.bf16.mxu0 0
        %745 = vmatpush1.bf16.msra.mxu0 0
        %746 = vmatprep.mubr.bf16.mxu0 0
        %747 = vmatmul.mubr.bf16.gmra.mrb[0].mxu0 %v712
        %v748 = vpop.f32.mrb[0].mxu0
        %v749 = vadd.f32 0.0, %v748
        %v750 = vpop.f32.mrb[0].mxu0
        %v751 = vpop.f32.mrb[0].mxu0
        %v752 = vadd.f32 0.0, %v751
        %v753 = vpop.f32.mrb[0].mxu0
        %754 = vdwg.mxu0
        %v755 = vmul.f32 %v330, %v749
        %v756 = vmul.f32 %v331, %v752
        %757 = vmatprep.subr.bf16.mxu0 0
        %758 = vmatpush1.bf16.msra.mxu0 %v709
        %759 = vmatprep.subr.bf16.mxu0 0
        %760 = vmatpush1.bf16.msra.mxu0 0
        %761 = vmatprep.subr.bf16.mxu0 0
        %762 = vmatpush1.bf16.msra.mxu0 0
        %763 = vmatprep.subr.bf16.mxu0 0
        %764 = vmatpush1.bf16.msra.mxu0 0
        %765 = vmatprep.subr.bf16.mxu0 0
        %766 = vmatpush1.bf16.msra.mxu0 0
        %767 = vmatprep.subr.bf16.mxu0 0
        %768 = vmatpush1.bf16.msra.mxu0 0
        %769 = vmatprep.subr.bf16.mxu0 0
        %770 = vmatpush1.bf16.msra.mxu0 0
        %771 = vmatprep.subr.bf16.mxu0 0
        %772 = vmatpush1.bf16.msra.mxu0 0
        %773 = vmatprep.subr.bf16.mxu0 0
        %774 = vmatpush1.bf16.msra.mxu0 0
        %775 = vmatprep.subr.bf16.mxu0 0
        %776 = vmatpush1.bf16.msra.mxu0 0
        %777 = vmatprep.subr.bf16.mxu0 0
        %778 = vmatpush1.bf16.msra.mxu0 0
        %779 = vmatprep.subr.bf16.mxu0 0
        %780 = vmatpush1.bf16.msra.mxu0 0
        %781 = vmatprep.subr.bf16.mxu0 0
        %782 = vmatpush1.bf16.msra.mxu0 0
        %783 = vmatprep.subr.bf16.mxu0 0
        %784 = vmatpush1.bf16.msra.mxu0 0
        %785 = vmatprep.subr.bf16.mxu0 0
        %786 = vmatpush1.bf16.msra.mxu0 0
        %787 = vmatprep.subr.bf16.mxu0 0
        %788 = vmatpush1.bf16.msra.mxu0 0
        %789 = vmatprep.mubr.bf16.mxu0 0
        %790 = vmatmul.mubr.bf16.gmra.mrb[0].mxu0 %v712
        %v791 = vpop.f32.mrb[0].mxu0
        %v792 = vadd.f32 %v755, %v791
        %v793 = vpop.f32.mrb[0].mxu0
        %v794 = vpop.f32.mrb[0].mxu0
        %v795 = vadd.f32 %v756, %v794
        %v796 = vpop.f32.mrb[0].mxu0
        %797 = vdwg.mxu0
        %v798 = vadd.f32 %v792, 1e-10
        %v799 = vadd.f32 %v795, 1e-10
        %v800 = vrcp.pop %v798
        %v801 = vmul.f32 %v755, %v800
        %v802 = vrcp.pop %v799
        %v803 = vmul.f32 %v756, %v802
        %v804 = vmax.f32 %v801, 1e-10
        %v805 = vmax.f32 %v803, 1e-10
        %v806 = vmin.f32 %v804, 1.0
        %v807 = vmin.f32 %v805, 1.0
        %v808 = vsub.f32 0.0, %v330
        %v809 = vsub.f32 0.0, %v331
        %v810 = vlog2.pop %v806
        %v811 = vmul.f32 %v810, 0.6931472
        %v812 = vlog2.pop %v807
        %v813 = vmul.f32 %v812, 0.6931472
        %v814 = vmul.f32 %v808, %v811
        %v815 = vmul.f32 %v809, %v813
        %s816 = sld [smem:[#allocation10 + %s33]]
        %v817 = vld [vmem:[#allocation7] sm:$0xff]
        %v818 = vld [vmem:[#allocation7 + $0x8] sm:$0xff]
        %v819 = vmul.f32 %v638, %v817
        %v820 = vmul.f32 %v639, %v818
        %v821 = vstv %s816
        %v822 = vmul.f32 %v821, %v819
        %v823 = vmul.f32 %v821, %v820
        %v824 = vadd.f32 %v530, %v822
        %v825 = vadd.f32 %v531, %v823
        %s826 = sld [smem:[#allocation14 + %s33]]
        %v827 = vstv %s826
        %v828 = vmul.f32 %v827, %v814
        %v829 = vmul.f32 %v827, %v815
        %v830 = vadd.f32 %v824, %v828
        %v831 = vadd.f32 %v825, %v829
        %v832 = vld [vmem:[%s322] sm:$0xff]
        %v833 = vsel %vm535, %v830, 0.0
        %v834 = vsel %vm535, %v831, 0.0
        %v835 = vadd.f32 %v833, %v834
        %836 = vadd.xlane.f32.xlu0 %v835
        %v837 = vpop.xlane.xlu0 %836
        %v838 = vrot.slane %v837, 4
        %v839 = vadd.f32 %v837, %v838
        %v840 = vrot.slane %v839, 2
        %v841 = vadd.f32 %v839, %v840
        %v842 = vrot.slane %v841, 1
        %v843 = vadd.f32 %v841, %v842
        %s844 = vtos %v843
        %v845 = vstv %s844
        %v846 = vadd.f32 %v832, %v845
        %847 = vst [vmem:[%s322] sm:$0xff] %v846
        %s848 = sand.u32 %s165, 1
        %s849 = scalar_lea.sflag [#allocation12], %s848
        %s850 = sand.u32 %s165, 1
        %s851 = smul.addr %s850, 8
        %s852 = scalar_lea.vmem [#allocation19], %s851
        // Predicated region
        $region61: #{tpu_custom_call.1} parent=39 // pred_check
          %p853 = pneg %p175
        $region62: #{tpu_custom_call.1} parent=39 // pred_check_branch
          %855 = sbr.rel (%p853) target = $region64
        $region63: #{tpu_custom_call.1} parent=39 // pred_region
          %s857 = ssub.s32 128, 128
          %858 = vsyncadd %s849, %s857
          %s859 = smul.addr %s32, 128
          %s860 = scalar_lea.hbm %s5, %s859
          %s862 = sshll.u32 %s852, 4
          %s863 = int_to_ptr.vmem [resolvable:$true] %s862
          %865 = dma.vmem_to_hbm [thread:$0]  %s863, 128, %s860, %s849
        $region64: #{tpu_custom_call.1} parent=39 // pred_fallthru
          _
      $region40: #{tpu_custom_call.1} parent=5 // pred_fallthru
        _
      %p866 = scmp.le.s32.totalorder 2, %s23
      // Predicated region
      $region65: #{tpu_custom_call.1} parent=5 // pred_check
        %p867 = pneg %p866
      $region66: #{tpu_custom_call.1} parent=5 // pred_check_branch
        %869 = sbr.rel (%p867) target = $region68
      $region67: #{tpu_custom_call.1} parent=5 // pred_region
        %s870 = ssub.s32 %s23, 2
        // Predicated region
        $region69: #{tpu_custom_call.1} parent=67 // pred_check
          %p871 = pneg %p181
        $region70: #{tpu_custom_call.1} parent=67 // pred_check_branch
          %873 = sbr.rel (%p871) target = $region72
        $region71: #{tpu_custom_call.1} parent=67 // pred_region
          %s874 = sand.u32 %s166, 1
          %s875 = scalar_lea.sflag [#allocation12], %s874
          %s876 = sand.u32 %s166, 1
          %s877 = smul.addr %s876, 8
          %s878 = scalar_lea.vmem [#allocation19], %s877
          %879 = dma.done %s875, 128
        $region72: #{tpu_custom_call.1} parent=67 // pred_fallthru
          _
      $region68: #{tpu_custom_call.1} parent=5 // pred_fallthru
        _
    $region6: #{tpu_custom_call.1} parent=1 // loop_footer
      %s27 = sadd.s32 1, %s23
    $region7: #{tpu_custom_call.1} parent=1 // loop_footer_branch
      %22 = sbr.rel target = $region3
    $region8: #{tpu_custom_call.1} parent=1 // loop_exit
      _
    %880 = vsyncpa [#allocation11], 1
    %s881 = scalar_lea.sflag [#allocation11], 1
    %882 = vsyncpa %s881, 1
    %883 = vsyncpa [#allocation18], 1
    %s884 = scalar_lea.sflag [#allocation18], 1
    %885 = vsyncpa %s884, 1
    %886 = vsyncpa [#allocation12], 1
    %s887 = scalar_lea.sflag [#allocation12], 1
    %888 = vsyncpa %s887, 1
    %889 = vsyncpa [#allocation13], 1
    %s890 = scalar_lea.sflag [#allocation13], 1
    %891 = vsyncpa %s890, 1
    %892 = vsyncpa [#allocation15], 1

</llo_original>
